<compile_context>
chip_gen: v5e
topology: v5e:2x2
jax: 0.10.0
libtpu: 0.0.40
codegen_flags: <defaults>
</compile_context>

<pallas_src>
import jax
import jax.numpy as jnp
from jax.experimental import pallas as pl
from jax.experimental.pallas import tpu as pltpu


def _round_up(n, m):
    return ((n + m - 1) // m) * m


def _mlp_kernel(x_ref,
                w1_ref, b1_ref,
                w2_ref, b2_ref,
                w3_ref, b3_ref,
                w4_ref, b4_ref,
                w5_ref, b5_ref,
                o_ref):
    # x tile and weights are bf16 (full-rate MXU operands); accumulation,
    # bias-add and ReLU stay in f32, cast back to bf16 once per layer to feed
    # the next dot.
    def layer(h_bf16, w_ref, b_ref, relu):
        acc = jnp.dot(h_bf16, w_ref[...],
                      preferred_element_type=jnp.float32) + b_ref[...]
        return jnp.maximum(acc, 0.0) if relu else acc

    h = layer(x_ref[...], w1_ref, b1_ref, True).astype(jnp.bfloat16)
    h = layer(h, w2_ref, b2_ref, True).astype(jnp.bfloat16)
    h = layer(h, w3_ref, b3_ref, True).astype(jnp.bfloat16)
    h = layer(h, w4_ref, b4_ref, True).astype(jnp.bfloat16)
    h = layer(h, w5_ref, b5_ref, False)
    o_ref[...] = h.astype(o_ref.dtype)


def _vmem_capacity_bytes():
    try:
        return int(pltpu.get_tpu_info().vmem_capacity_bytes)
    except Exception:                       # perf-only decision; safe fallback
        return 128 * 1024 * 1024


def _choose_tile_b(batch, cap_rows):
    """Batch tile: multiple of 128 (prefer 256/512/1024) when batch is large,
    >=2 tiles whenever batch >= 256 (keeps both v7x TensorCores busy via the
    "parallel" grid axis), bounded by cap_rows so the double-buffered I/O tiles
    plus f32 temporaries fit in scoped VMEM."""
    if batch < 128:
        return _round_up(max(batch, 1), 8)          # tiny batch: one padded tile
    target = _round_up(batch, 128)
    min_tiles = 2 if batch >= 256 else 1
    for t in (1024, 512, 256, 128):
        if t <= cap_rows and t <= target and pl.cdiv(target, t) >= min_tiles:
            return t
    return 128


def mlp_classifier_forward(x, params, *, tile_b=None):
    """x: (B, input_dim) float32. params: w{i} of shape (in, out) (= PyTorch
    weight transposed), b{i} of shape (1, out); float32 masters."""
    B, D = x.shape

    vmem_cap = _vmem_capacity_bytes()
    # Smaller tile cap on 64 MiB parts (v7x); 512-row tiles already sit near
    # the roofline, so the smaller cap costs little.
    cap_rows = 512 if vmem_cap <= 64 * 1024 * 1024 else 1024
    if tile_b is None:
        tile_b = _choose_tile_b(B, cap_rows)
    assert tile_b % 8 == 0, "tile_b must be a multiple of 8 (f32/bf16 sublane)"

    # Lane padding: widths up to multiples of 128. Zero rows/cols are
    # numerically inert (zero-weight contributions, ReLU(0+0)=0).
    dims = [D] + [params[f"w{i}"].shape[1] for i in range(1, 6)]
    pdims = [_round_up(d, 128) for d in dims]
    out_dim = dims[-1]

    ws, bs = [], []
    for i in range(1, 6):
        w = params[f"w{i}"].astype(jnp.bfloat16)
        b = params[f"b{i}"].astype(jnp.float32)
        din, dout = w.shape
        ws.append(jnp.pad(w, ((0, pdims[i - 1] - din), (0, pdims[i] - dout))))
        bs.append(jnp.pad(b, ((0, 0), (0, pdims[i] - dout))))

    n_steps = pl.cdiv(B, tile_b)
    Bp, Dp, Op = n_steps * tile_b, pdims[0], pdims[-1]
    # bf16 input halves the per-tile x DMA and its double-buffered VMEM.
    x_p = jnp.pad(x.astype(jnp.bfloat16), ((0, Bp - B), (0, Dp - D)))

    def full_spec(arr):
        # Resident parameter: block index never changes, so single-buffer it.
        return pl.BlockSpec(arr.shape, lambda i: (0,) * arr.ndim,
                            pipeline_mode=pl.Buffered(1))

    in_specs = [pl.BlockSpec((tile_b, Dp), lambda i: (i, 0))]
    for w, b in zip(ws, bs):
        in_specs += [full_spec(w), full_spec(b)]

    # VMEM budget: double-buffered bf16 x tile + f32 out tile, single-buffered
    # bf16 weights / f32 biases, rough f32 layer temporaries.
    act_cols = sum(pdims[1:])
    est_bytes = (2 * tile_b * Dp * 2
                 + 2 * tile_b * Op * 4
                 + sum(w.size * 2 + b.size * 4 for w, b in zip(ws, bs))
                 + 2 * tile_b * act_cols * 4)
    vmem_limit = None
    if est_bytes > 30 * 1024 * 1024:
        # Generation-aware: never request more than physical VMEM minus
        # headroom (v7x has only 64 MiB).
        vmem_limit = max(32 * 1024 * 1024,
                         min(int(est_bytes * 3 // 2),
                             vmem_cap - 8 * 1024 * 1024))

    flat_params = [a for pair in zip(ws, bs) for a in pair]

    out_p = pl.pallas_call(
        _mlp_kernel,
        out_shape=jax.ShapeDtypeStruct((Bp, Op), jnp.float32),
        grid_spec=pltpu.PrefetchScalarGridSpec(
            num_scalar_prefetch=0,
            grid=(n_steps,),
            in_specs=in_specs,
            out_specs=pl.BlockSpec((tile_b, Op), lambda i: (i, 0)),
        ),
        compiler_params=pltpu.CompilerParams(
            dimension_semantics=("parallel",),   # v7x: >=2 tiles shard over 2 TCs
            vmem_limit_bytes=vmem_limit),
    )(x_p, *flat_params)

    if Bp != B or Op != out_dim:
        out_p = out_p[:B, :out_dim]
    return out_p


def init_params(key, input_dim):
    """Deterministic synthetic params. Weights stored (in, out) = W.T (f32 master)."""
    h1 = input_dim * 2
    h2 = h1 * 2
    out_dim = h2 * 2
    dims = [(input_dim, h1), (h1, h2), (h2, h2), (h2, h2), (h2, out_dim)]
    params = {}
    keys = jax.random.split(key, 2 * len(dims))
    for idx, (din, dout) in enumerate(dims):
        kw, kb = keys[2 * idx], keys[2 * idx + 1]
        scale = 1.0 / jnp.sqrt(jnp.float32(din))
        params[f"w{idx+1}"] = (jax.random.uniform(kw, (din, dout), jnp.float32,
                                                  minval=-1.0, maxval=1.0) * scale)
        # bias kept 2D (1, out) for clean lane-major broadcast inside the kernel
        params[f"b{idx+1}"] = (jax.random.uniform(kb, (1, dout), jnp.float32,
                                                  minval=-1.0, maxval=1.0) * scale)
    return params


def reference_forward(x, params):
    """Pure f32 reference matching the PyTorch module's math."""
    h = x
    for i in range(1, 5):
        h = jnp.maximum(h @ params[f"w{i}"] + params[f"b{i}"], 0.0)
    return h @ params["w5"] + params["b5"]


if __name__ == "__main__":
    key = jax.random.PRNGKey(0)
    k_x, k_p = jax.random.split(key)

    # NOTE: at these demo shapes (B=8, D=32) the MXU is mostly idle and the
    # kernel is launch/latency-bound; the tiling / bf16 / padding changes pay
    # off once the real workload presents >=128-256 rows and >=128 lanes.
    batch = 8
    input_dim = 32
    x = jax.random.normal(k_x, (batch, input_dim), dtype=jnp.float32)
    params = init_params(k_p, input_dim)

    out = mlp_classifier_forward(x, params)
    out = jax.block_until_ready(out)

    ref = reference_forward(x, params)
    assert out.shape == (batch, input_dim * 8), out.shape
    # bf16 MXU operands with f32 accumulation -> loosened tolerance vs f32 ref.
    assert jnp.allclose(out, ref, atol=1e-1, rtol=1e-1), (
        float(jnp.max(jnp.abs(out - ref))))

    print("KERNEL_OK")
</pallas_src>

<mosaic_0001>
module attributes {stable_mosaic.version = 11 : i64} {
  func.func @_mlp_kernel(%arg0: i32, %arg1: memref<8x128xbf16, #tpu.memory_space<vmem>>, %arg2: memref<128x128xbf16, #tpu.memory_space<vmem>>, %arg3: memref<1x128xf32, #tpu.memory_space<vmem>>, %arg4: memref<128x128xbf16, #tpu.memory_space<vmem>>, %arg5: memref<1x128xf32, #tpu.memory_space<vmem>>, %arg6: memref<128x128xbf16, #tpu.memory_space<vmem>>, %arg7: memref<1x128xf32, #tpu.memory_space<vmem>>, %arg8: memref<128x128xbf16, #tpu.memory_space<vmem>>, %arg9: memref<1x128xf32, #tpu.memory_space<vmem>>, %arg10: memref<128x256xbf16, #tpu.memory_space<vmem>>, %arg11: memref<1x256xf32, #tpu.memory_space<vmem>>, %arg12: memref<8x256xf32, #tpu.memory_space<vmem>>) attributes {dimension_semantics = [#tpu.dimension_semantics<parallel>], iteration_bounds = array<i64: 1>, scalar_prefetch = 0 : i64, scratch_operands = 0 : i64, tpu.core_type = #tpu.core_type<tc>, window_params = [{transform_indices = @transform_0, window_bounds = array<i64: 8, 128>}, {pipeline_mode = #tpu.pipeline_mode<synchronous>, transform_indices = @transform_1, window_bounds = array<i64: 128, 128>}, {pipeline_mode = #tpu.pipeline_mode<synchronous>, transform_indices = @transform_2, window_bounds = array<i64: 1, 128>}, {pipeline_mode = #tpu.pipeline_mode<synchronous>, transform_indices = @transform_3, window_bounds = array<i64: 128, 128>}, {pipeline_mode = #tpu.pipeline_mode<synchronous>, transform_indices = @transform_4, window_bounds = array<i64: 1, 128>}, {pipeline_mode = #tpu.pipeline_mode<synchronous>, transform_indices = @transform_5, window_bounds = array<i64: 128, 128>}, {pipeline_mode = #tpu.pipeline_mode<synchronous>, transform_indices = @transform_6, window_bounds = array<i64: 1, 128>}, {pipeline_mode = #tpu.pipeline_mode<synchronous>, transform_indices = @transform_7, window_bounds = array<i64: 128, 128>}, {pipeline_mode = #tpu.pipeline_mode<synchronous>, transform_indices = @transform_8, window_bounds = array<i64: 1, 128>}, {pipeline_mode = #tpu.pipeline_mode<synchronous>, transform_indices = @transform_9, window_bounds = array<i64: 128, 256>}, {pipeline_mode = #tpu.pipeline_mode<synchronous>, transform_indices = @transform_10, window_bounds = array<i64: 1, 256>}, {transform_indices = @transform_11, window_bounds = array<i64: 8, 256>}]} {
    %c0 = arith.constant 0 : index
    %c0_0 = arith.constant 0 : index
    %0 = vector.load %arg1[%c0, %c0_0] : memref<8x128xbf16, #tpu.memory_space<vmem>>, vector<8x128xbf16>
    %c0_1 = arith.constant 0 : index
    %c0_2 = arith.constant 0 : index
    %1 = vector.load %arg2[%c0_1, %c0_2] : memref<128x128xbf16, #tpu.memory_space<vmem>>, vector<128x128xbf16>
    %cst = arith.constant dense<0.000000e+00> : vector<8x128xf32>
    %2 = tpu.matmul %0, %1, %cst {dimension_numbers = #tpu.dot_dimension_numbers<[1], [0], [0], [1], [0, 0, 1, 1], [], []>} : vector<8x128xbf16>, vector<128x128xbf16>, vector<8x128xf32> -> vector<8x128xf32>
    %c0_3 = arith.constant 0 : index
    %c0_4 = arith.constant 0 : index
    %3 = vector.load %arg3[%c0_3, %c0_4] : memref<1x128xf32, #tpu.memory_space<vmem>>, vector<1x128xf32>
    %4 = vector.broadcast %3 : vector<1x128xf32> to vector<8x128xf32>
    %5 = arith.addf %2, %4 : vector<8x128xf32>
    %cst_5 = arith.constant 0.000000e+00 : f32
    %6 = vector.broadcast %cst_5 : f32 to vector<8x128xf32>
    %7 = arith.maximumf %5, %6 : vector<8x128xf32>
    %8 = arith.truncf %7 : vector<8x128xf32> to vector<8x128xbf16>
    %c0_6 = arith.constant 0 : index
    %c0_7 = arith.constant 0 : index
    %9 = vector.load %arg4[%c0_6, %c0_7] : memref<128x128xbf16, #tpu.memory_space<vmem>>, vector<128x128xbf16>
    %cst_8 = arith.constant dense<0.000000e+00> : vector<8x128xf32>
    %10 = tpu.matmul %8, %9, %cst_8 {dimension_numbers = #tpu.dot_dimension_numbers<[1], [0], [0], [1], [0, 0, 1, 1], [], []>} : vector<8x128xbf16>, vector<128x128xbf16>, vector<8x128xf32> -> vector<8x128xf32>
    %c0_9 = arith.constant 0 : index
    %c0_10 = arith.constant 0 : index
    %11 = vector.load %arg5[%c0_9, %c0_10] : memref<1x128xf32, #tpu.memory_space<vmem>>, vector<1x128xf32>
    %12 = vector.broadcast %11 : vector<1x128xf32> to vector<8x128xf32>
    %13 = arith.addf %10, %12 : vector<8x128xf32>
    %cst_11 = arith.constant 0.000000e+00 : f32
    %14 = vector.broadcast %cst_11 : f32 to vector<8x128xf32>
    %15 = arith.maximumf %13, %14 : vector<8x128xf32>
    %16 = arith.truncf %15 : vector<8x128xf32> to vector<8x128xbf16>
    %c0_12 = arith.constant 0 : index
    %c0_13 = arith.constant 0 : index
    %17 = vector.load %arg6[%c0_12, %c0_13] : memref<128x128xbf16, #tpu.memory_space<vmem>>, vector<128x128xbf16>
    %cst_14 = arith.constant dense<0.000000e+00> : vector<8x128xf32>
    %18 = tpu.matmul %16, %17, %cst_14 {dimension_numbers = #tpu.dot_dimension_numbers<[1], [0], [0], [1], [0, 0, 1, 1], [], []>} : vector<8x128xbf16>, vector<128x128xbf16>, vector<8x128xf32> -> vector<8x128xf32>
    %c0_15 = arith.constant 0 : index
    %c0_16 = arith.constant 0 : index
    %19 = vector.load %arg7[%c0_15, %c0_16] : memref<1x128xf32, #tpu.memory_space<vmem>>, vector<1x128xf32>
    %20 = vector.broadcast %19 : vector<1x128xf32> to vector<8x128xf32>
    %21 = arith.addf %18, %20 : vector<8x128xf32>
    %cst_17 = arith.constant 0.000000e+00 : f32
    %22 = vector.broadcast %cst_17 : f32 to vector<8x128xf32>
    %23 = arith.maximumf %21, %22 : vector<8x128xf32>
    %24 = arith.truncf %23 : vector<8x128xf32> to vector<8x128xbf16>
    %c0_18 = arith.constant 0 : index
    %c0_19 = arith.constant 0 : index
    %25 = vector.load %arg8[%c0_18, %c0_19] : memref<128x128xbf16, #tpu.memory_space<vmem>>, vector<128x128xbf16>
    %cst_20 = arith.constant dense<0.000000e+00> : vector<8x128xf32>
    %26 = tpu.matmul %24, %25, %cst_20 {dimension_numbers = #tpu.dot_dimension_numbers<[1], [0], [0], [1], [0, 0, 1, 1], [], []>} : vector<8x128xbf16>, vector<128x128xbf16>, vector<8x128xf32> -> vector<8x128xf32>
    %c0_21 = arith.constant 0 : index
    %c0_22 = arith.constant 0 : index
    %27 = vector.load %arg9[%c0_21, %c0_22] : memref<1x128xf32, #tpu.memory_space<vmem>>, vector<1x128xf32>
    %28 = vector.broadcast %27 : vector<1x128xf32> to vector<8x128xf32>
    %29 = arith.addf %26, %28 : vector<8x128xf32>
    %cst_23 = arith.constant 0.000000e+00 : f32
    %30 = vector.broadcast %cst_23 : f32 to vector<8x128xf32>
    %31 = arith.maximumf %29, %30 : vector<8x128xf32>
    %32 = arith.truncf %31 : vector<8x128xf32> to vector<8x128xbf16>
    %c0_24 = arith.constant 0 : index
    %c0_25 = arith.constant 0 : index
    %33 = vector.load %arg10[%c0_24, %c0_25] : memref<128x256xbf16, #tpu.memory_space<vmem>>, vector<128x256xbf16>
    %cst_26 = arith.constant dense<0.000000e+00> : vector<8x256xf32>
    %34 = tpu.matmul %32, %33, %cst_26 {dimension_numbers = #tpu.dot_dimension_numbers<[1], [0], [0], [1], [0, 0, 1, 1], [], []>} : vector<8x128xbf16>, vector<128x256xbf16>, vector<8x256xf32> -> vector<8x256xf32>
    %c0_27 = arith.constant 0 : index
    %c0_28 = arith.constant 0 : index
    %35 = vector.load %arg11[%c0_27, %c0_28] : memref<1x256xf32, #tpu.memory_space<vmem>>, vector<1x256xf32>
    %36 = vector.broadcast %35 : vector<1x256xf32> to vector<8x256xf32>
    %37 = arith.addf %34, %36 : vector<8x256xf32>
    %c0_29 = arith.constant 0 : index
    %c0_30 = arith.constant 0 : index
    %38 = vector.load %arg12[%c0_29, %c0_30] : memref<8x256xf32, #tpu.memory_space<vmem>>, vector<8x256xf32>
    tpu.vector_store %arg12[%c0_29, %c0_30], %37 {strides = array<i32>} : memref<8x256xf32, #tpu.memory_space<vmem>>, vector<8x256xf32>,
    return
  }
  func.func @transform_0(%arg0: i32) -> (i32, i32) {
    %c0_i32 = arith.constant 0 : i32
    %c0_i32_0 = arith.constant 0 : i32
    return %arg0, %c0_i32 : i32, i32
  }
  func.func @transform_1(%arg0: i32) -> (i32, i32) {
    %c0_i32 = arith.constant 0 : i32
    %c0_i32_0 = arith.constant 0 : i32
    %c0_i32_1 = arith.constant 0 : i32
    return %c0_i32, %c0_i32_0 : i32, i32
  }
  func.func @transform_2(%arg0: i32) -> (i32, i32) {
    %c0_i32 = arith.constant 0 : i32
    %c0_i32_0 = arith.constant 0 : i32
    %c0_i32_1 = arith.constant 0 : i32
    return %c0_i32, %c0_i32_0 : i32, i32
  }
  func.func @transform_3(%arg0: i32) -> (i32, i32) {
    %c0_i32 = arith.constant 0 : i32
    %c0_i32_0 = arith.constant 0 : i32
    %c0_i32_1 = arith.constant 0 : i32
    return %c0_i32, %c0_i32_0 : i32, i32
  }
  func.func @transform_4(%arg0: i32) -> (i32, i32) {
    %c0_i32 = arith.constant 0 : i32
    %c0_i32_0 = arith.constant 0 : i32
    %c0_i32_1 = arith.constant 0 : i32
    return %c0_i32, %c0_i32_0 : i32, i32
  }
  func.func @transform_5(%arg0: i32) -> (i32, i32) {
    %c0_i32 = arith.constant 0 : i32
    %c0_i32_0 = arith.constant 0 : i32
    %c0_i32_1 = arith.constant 0 : i32
    return %c0_i32, %c0_i32_0 : i32, i32
  }
  func.func @transform_6(%arg0: i32) -> (i32, i32) {
    %c0_i32 = arith.constant 0 : i32
    %c0_i32_0 = arith.constant 0 : i32
    %c0_i32_1 = arith.constant 0 : i32
    return %c0_i32, %c0_i32_0 : i32, i32
  }
  func.func @transform_7(%arg0: i32) -> (i32, i32) {
    %c0_i32 = arith.constant 0 : i32
    %c0_i32_0 = arith.constant 0 : i32
    %c0_i32_1 = arith.constant 0 : i32
    return %c0_i32, %c0_i32_0 : i32, i32
  }
  func.func @transform_8(%arg0: i32) -> (i32, i32) {
    %c0_i32 = arith.constant 0 : i32
    %c0_i32_0 = arith.constant 0 : i32
    %c0_i32_1 = arith.constant 0 : i32
    return %c0_i32, %c0_i32_0 : i32, i32
  }
  func.func @transform_9(%arg0: i32) -> (i32, i32) {
    %c0_i32 = arith.constant 0 : i32
    %c0_i32_0 = arith.constant 0 : i32
    %c0_i32_1 = arith.constant 0 : i32
    return %c0_i32, %c0_i32_0 : i32, i32
  }
  func.func @transform_10(%arg0: i32) -> (i32, i32) {
    %c0_i32 = arith.constant 0 : i32
    %c0_i32_0 = arith.constant 0 : i32
    %c0_i32_1 = arith.constant 0 : i32
    return %c0_i32, %c0_i32_0 : i32, i32
  }
  func.func @transform_11(%arg0: i32) -> (i32, i32) {
    %c0_i32 = arith.constant 0 : i32
    %c0_i32_0 = arith.constant 0 : i32
    return %arg0, %c0_i32 : i32, i32
  }
}

</mosaic_0001>

<llo_original>
// kernel: tpu_custom_call.1
$region0: #{tpu_custom_call.1}
  #allocation0 [shape = 'u32[]', space=smem, size = 0x4, offset = 0x4, fixed_abs, tag = 'smem constant byte address 0x4 - core index']
  #allocation1 [shape = 'u32[72,128]{1,0:T(1,128)}', space=vmem, size = 0x9000, scoped, tag = 'internal scratch']
  %s0 = inlined_call_operand.hbm [shape: bf16[8,128], index: 0, kind: input, shape index: {}]
  %s1 = inlined_call_operand.hbm [shape: bf16[128,128], index: 1, kind: input, shape index: {}]
  %s2 = inlined_call_operand.vmem [shape: f32[1,128], index: 2, kind: input, shape index: {}]
  %s3 = inlined_call_operand.hbm [shape: bf16[128,128], index: 3, kind: input, shape index: {}]
  %s4 = inlined_call_operand.hbm [shape: f32[1,128], index: 4, kind: input, shape index: {}]
  %s5 = inlined_call_operand.hbm [shape: bf16[128,128], index: 5, kind: input, shape index: {}]
  %s6 = inlined_call_operand.vmem [shape: f32[1,128], index: 6, kind: input, shape index: {}]
  %s7 = inlined_call_operand.hbm [shape: bf16[128,128], index: 7, kind: input, shape index: {}]
  %s8 = inlined_call_operand.vmem [shape: f32[1,128], index: 8, kind: input, shape index: {}]
  %s9 = inlined_call_operand.hbm [shape: bf16[128,256], index: 9, kind: input, shape index: {}]
  %s10 = inlined_call_operand.vmem [shape: f32[1,256], index: 10, kind: input, shape index: {}]
  %s11 = inlined_call_operand.hbm [shape: f32[8,256], index: 11, kind: output, shape index: {}]
  %s12 = sld [smem:[#allocation0]]
  $region82: #{tpu_custom_call.1} parent=0
    _
  %s14 = ssub.s32 1, %s12
  %s15 = scalar_select 0, %s14, %s12
  $region1: #{tpu_custom_call.1} parent=0
    #allocation2 [shape = 'u8[2048]{0}', space=vmem, size = 0x800, scoped, tag = 'input window, operand 0, single buffered']
    #allocation3 [shape = 's32[1]{0}', space=sflag, size = 0x4, scoped, tag = 'scoped memory for tpu_custom_call.1']
    #allocation4 [shape = 's32[1]{0}', space=sflag, size = 0x4, scoped, tag = 'scoped memory for tpu_custom_call.1']
    #allocation5 [shape = 'u8[32768]{0}', space=vmem, size = 0x8000, scoped, tag = 'input window, operand 1, single buffered']
    #allocation6 [shape = 's32[1]{0}', space=sflag, size = 0x4, scoped, tag = 'scoped memory for tpu_custom_call.1']
    #allocation7 [shape = 'u8[32768]{0}', space=vmem, size = 0x8000, scoped, tag = 'input window, operand 3, single buffered']
    #allocation8 [shape = 'u8[512]{0}', space=vmem, size = 0x400, scoped, tag = 'input window, operand 4, single buffered']
    #allocation9 [shape = 's32[1]{0}', space=sflag, size = 0x4, scoped, tag = 'scoped memory for tpu_custom_call.1']
    #allocation10 [shape = 'u8[32768]{0}', space=vmem, size = 0x8000, scoped, tag = 'input window, operand 5, single buffered']
    #allocation11 [shape = 'u8[32768]{0}', space=vmem, size = 0x8000, scoped, tag = 'input window, operand 7, single buffered']
    #allocation12 [shape = 's32[1]{0}', space=sflag, size = 0x4, scoped, tag = 'scoped memory for tpu_custom_call.1']
    #allocation13 [shape = 'u8[65536]{0}', space=vmem, size = 0x10000, scoped, tag = 'input window, operand 9, single buffered']
    #allocation14 [shape = 'u8[8192]{0}', space=vmem, size = 0x2000, scoped, tag = 'output window, operand 0, single buffered']
    %16 = vsyncpa [#allocation3], 0
    %17 = vsyncpa [#allocation6], 0
    %18 = vsyncpa [#allocation9], 0
    %19 = vsyncpa [#allocation12], 0
    %20 = vsyncpa [#allocation4], 0
    // Predicated region
    $region2: #{tpu_custom_call.1} parent=1 // pred_check
      _
    $region3: #{tpu_custom_call.1} parent=1 // pred_check_branch
      %22 = sbr.rel (0) target = $region5
    $region4: #{tpu_custom_call.1} parent=1 // pred_region
      %24 = vsyncadd [#allocation3], 0
      %s26 = sshll.u32 %s0, 4
      %s27 = int_to_ptr.hbm [resolvable:$true] %s26
      %s28 = sshll.u32 [#allocation2], 4
      %s29 = int_to_ptr.vmem [resolvable:$true] %s28
      %31 = dma.hbm_to_vmem [thread:$0]  %s27, 64, %s29, [#allocation3]
    $region5: #{tpu_custom_call.1} parent=1 // pred_fallthru
      _
    // Predicated region
    $region6: #{tpu_custom_call.1} parent=1 // pred_check
      _
    $region7: #{tpu_custom_call.1} parent=1 // pred_check_branch
      %33 = sbr.rel (0) target = $region9
    $region8: #{tpu_custom_call.1} parent=1 // pred_region
      %35 = vsyncadd [#allocation6], 0
      %s36 = sshll.u32 %s1, 4
      %s37 = int_to_ptr.hbm [resolvable:$true] %s36
      %s38 = sshll.u32 [#allocation5], 4
      %s39 = int_to_ptr.vmem [resolvable:$true] %s38
      %44 = dma.hbm_to_vmem [thread:$0]  %s37, 1024, %s39, [#allocation6], 64, 64, 4
    $region9: #{tpu_custom_call.1} parent=1 // pred_fallthru
      _
    // Predicated region
    $region10: #{tpu_custom_call.1} parent=1 // pred_check
      _
    $region11: #{tpu_custom_call.1} parent=1 // pred_check_branch
      %46 = sbr.rel (0) target = $region13
    $region12: #{tpu_custom_call.1} parent=1 // pred_region
      _
    $region13: #{tpu_custom_call.1} parent=1 // pred_fallthru
      _
    // Predicated region
    $region14: #{tpu_custom_call.1} parent=1 // pred_check
      _
    $region15: #{tpu_custom_call.1} parent=1 // pred_check_branch
      %48 = sbr.rel (0) target = $region17
    $region16: #{tpu_custom_call.1} parent=1 // pred_region
      %50 = vsyncadd [#allocation6], 0
      %s51 = sshll.u32 %s3, 4
      %s52 = int_to_ptr.hbm [resolvable:$true] %s51
      %s53 = sshll.u32 [#allocation7], 4
      %s54 = int_to_ptr.vmem [resolvable:$true] %s53
      %59 = dma.hbm_to_vmem [thread:$0]  %s52, 1024, %s54, [#allocation6], 64, 64, 4
    $region17: #{tpu_custom_call.1} parent=1 // pred_fallthru
      _
    // Predicated region
    $region18: #{tpu_custom_call.1} parent=1 // pred_check
      _
    $region19: #{tpu_custom_call.1} parent=1 // pred_check_branch
      %61 = sbr.rel (0) target = $region21
    $region20: #{tpu_custom_call.1} parent=1 // pred_region
      %63 = vsyncadd [#allocation9], 0
      %s65 = sshll.u32 %s4, 4
      %s66 = int_to_ptr.hbm [resolvable:$true] %s65
      %s67 = sshll.u32 [#allocation8], 4
      %s68 = int_to_ptr.vmem [resolvable:$true] %s67
      %70 = dma.hbm_to_vmem [thread:$0]  %s66, 16, %s68, [#allocation9]
    $region21: #{tpu_custom_call.1} parent=1 // pred_fallthru
      _
    // Predicated region
    $region22: #{tpu_custom_call.1} parent=1 // pred_check
      _
    $region23: #{tpu_custom_call.1} parent=1 // pred_check_branch
      %72 = sbr.rel (0) target = $region25
    $region24: #{tpu_custom_call.1} parent=1 // pred_region
      %74 = vsyncadd [#allocation9], 0
      %s75 = sshll.u32 %s5, 4
      %s76 = int_to_ptr.hbm [resolvable:$true] %s75
      %s77 = sshll.u32 [#allocation10], 4
      %s78 = int_to_ptr.vmem [resolvable:$true] %s77
      %83 = dma.hbm_to_vmem [thread:$0]  %s76, 1024, %s78, [#allocation9], 64, 64, 4
    $region25: #{tpu_custom_call.1} parent=1 // pred_fallthru
      _
    // Predicated region
    $region26: #{tpu_custom_call.1} parent=1 // pred_check
      _
    $region27: #{tpu_custom_call.1} parent=1 // pred_check_branch
      %85 = sbr.rel (0) target = $region29
    $region28: #{tpu_custom_call.1} parent=1 // pred_region
      _
    $region29: #{tpu_custom_call.1} parent=1 // pred_fallthru
      _
    // Predicated region
    $region30: #{tpu_custom_call.1} parent=1 // pred_check
      _
    $region31: #{tpu_custom_call.1} parent=1 // pred_check_branch
      %87 = sbr.rel (0) target = $region33
    $region32: #{tpu_custom_call.1} parent=1 // pred_region
      %89 = vsyncadd [#allocation12], 0
      %s90 = sshll.u32 %s7, 4
      %s91 = int_to_ptr.hbm [resolvable:$true] %s90
      %s92 = sshll.u32 [#allocation11], 4
      %s93 = int_to_ptr.vmem [resolvable:$true] %s92
      %98 = dma.hbm_to_vmem [thread:$0]  %s91, 1024, %s93, [#allocation12], 64, 64, 4
    $region33: #{tpu_custom_call.1} parent=1 // pred_fallthru
      _
    // Predicated region
    $region34: #{tpu_custom_call.1} parent=1 // pred_check
      _
    $region35: #{tpu_custom_call.1} parent=1 // pred_check_branch
      %100 = sbr.rel (0) target = $region37
    $region36: #{tpu_custom_call.1} parent=1 // pred_region
      _
    $region37: #{tpu_custom_call.1} parent=1 // pred_fallthru
      _
    // Predicated region
    $region38: #{tpu_custom_call.1} parent=1 // pred_check
      _
    $region39: #{tpu_custom_call.1} parent=1 // pred_check_branch
      %102 = sbr.rel (0) target = $region41
    $region40: #{tpu_custom_call.1} parent=1 // pred_region
      %104 = vsyncadd [#allocation12], 0
      %s105 = sshll.u32 %s9, 4
      %s106 = int_to_ptr.hbm [resolvable:$true] %s105
      %s107 = sshll.u32 [#allocation13], 4
      %s108 = int_to_ptr.vmem [resolvable:$true] %s107
      %113 = dma.hbm_to_vmem [thread:$0]  %s106, 2048, %s108, [#allocation12], 128, 128, 8
    $region41: #{tpu_custom_call.1} parent=1 // pred_fallthru
      _
    // Predicated region
    $region42: #{tpu_custom_call.1} parent=1 // pred_check
      _
    $region43: #{tpu_custom_call.1} parent=1 // pred_check_branch
      %115 = sbr.rel (0) target = $region45
    $region44: #{tpu_custom_call.1} parent=1 // pred_region
      _
    $region45: #{tpu_custom_call.1} parent=1 // pred_fallthru
      _
    // Predicated region
    $region46: #{tpu_custom_call.1} parent=1 // pred_check
      _
    $region47: #{tpu_custom_call.1} parent=1 // pred_check_branch
      %117 = sbr.rel (0) target = $region49
    $region48: #{tpu_custom_call.1} parent=1 // pred_region
      %119 = dma.done [#allocation3], 64
    $region49: #{tpu_custom_call.1} parent=1 // pred_fallthru
      _
    // Predicated region
    $region50: #{tpu_custom_call.1} parent=1 // pred_check
      _
    $region51: #{tpu_custom_call.1} parent=1 // pred_check_branch
      %121 = sbr.rel (0) target = $region53
    $region52: #{tpu_custom_call.1} parent=1 // pred_region
      %123 = dma.done [#allocation6], 1024
    $region53: #{tpu_custom_call.1} parent=1 // pred_fallthru
      _
    // Predicated region
    $region54: #{tpu_custom_call.1} parent=1 // pred_check
      _
    $region55: #{tpu_custom_call.1} parent=1 // pred_check_branch
      %125 = sbr.rel (0) target = $region57
    $region56: #{tpu_custom_call.1} parent=1 // pred_region
      %127 = dma.done [#allocation6], 1024
    $region57: #{tpu_custom_call.1} parent=1 // pred_fallthru
      _
    // Predicated region
    $region58: #{tpu_custom_call.1} parent=1 // pred_check
      _
    $region59: #{tpu_custom_call.1} parent=1 // pred_check_branch
      %129 = sbr.rel (0) target = $region61
    $region60: #{tpu_custom_call.1} parent=1 // pred_region
      %131 = dma.done [#allocation9], 16
    $region61: #{tpu_custom_call.1} parent=1 // pred_fallthru
      _
    // Predicated region
    $region62: #{tpu_custom_call.1} parent=1 // pred_check
      _
    $region63: #{tpu_custom_call.1} parent=1 // pred_check_branch
      %133 = sbr.rel (0) target = $region65
    $region64: #{tpu_custom_call.1} parent=1 // pred_region
      %135 = dma.done [#allocation9], 1024
    $region65: #{tpu_custom_call.1} parent=1 // pred_fallthru
      _
    // Predicated region
    $region66: #{tpu_custom_call.1} parent=1 // pred_check
      _
    $region67: #{tpu_custom_call.1} parent=1 // pred_check_branch
      %137 = sbr.rel (0) target = $region69
    $region68: #{tpu_custom_call.1} parent=1 // pred_region
      %139 = dma.done [#allocation12], 1024
    $region69: #{tpu_custom_call.1} parent=1 // pred_fallthru
      _
    // Predicated region
    $region70: #{tpu_custom_call.1} parent=1 // pred_check
      _
    $region71: #{tpu_custom_call.1} parent=1 // pred_check_branch
      %141 = sbr.rel (0) target = $region73
    $region72: #{tpu_custom_call.1} parent=1 // pred_region
      %143 = dma.done [#allocation12], 2048
    $region73: #{tpu_custom_call.1} parent=1 // pred_fallthru
      _
    %v144 = vld [vmem:[#allocation2] sm:$0xf]
    %v145 = vld [vmem:[#allocation5] sm:$0xf]
    %v146 = vld [vmem:[#allocation5 + $0x4] sm:$0xf]
    %v147 = vld [vmem:[#allocation5 + $0x8] sm:$0xf]
    %v148 = vld [vmem:[#allocation5 + $0xc] sm:$0xf]
    %v149 = vld [vmem:[#allocation5 + $0x10] sm:$0xf]
    %v150 = vld [vmem:[#allocation5 + $0x14] sm:$0xf]
    %v151 = vld [vmem:[#allocation5 + $0x18] sm:$0xf]
    %v152 = vld [vmem:[#allocation5 + $0x1c] sm:$0xf]
    %v153 = vld [vmem:[#allocation5 + $0x20] sm:$0xf]
    %v154 = vld [vmem:[#allocation5 + $0x24] sm:$0xf]
    %v155 = vld [vmem:[#allocation5 + $0x28] sm:$0xf]
    %v156 = vld [vmem:[#allocation5 + $0x2c] sm:$0xf]
    %v157 = vld [vmem:[#allocation5 + $0x30] sm:$0xf]
    %v158 = vld [vmem:[#allocation5 + $0x34] sm:$0xf]
    %v159 = vld [vmem:[#allocation5 + $0x38] sm:$0xf]
    %v160 = vld [vmem:[#allocation5 + $0x3c] sm:$0xf]
    %v161 = vld [vmem:[%s2] sm:$0x1]
    %v163 = vperm.slane %v161, 0
    %v181 = vunpack.c.l.b16 %v145
    %v182 = vunpack.c.l.b16 %v146
    %v183 = vunpack.c.l.b16 %v147
    %v184 = vunpack.c.l.b16 %v148
    %v185 = vunpack.c.l.b16 %v149
    %v186 = vunpack.c.l.b16 %v150
    %v187 = vunpack.c.l.b16 %v151
    %v188 = vunpack.c.l.b16 %v152
    %v189 = vunpack.c.l.b16 %v153
    %v190 = vunpack.c.l.b16 %v154
    %v191 = vunpack.c.l.b16 %v155
    %v192 = vunpack.c.l.b16 %v156
    %v193 = vunpack.c.l.b16 %v157
    %v194 = vunpack.c.l.b16 %v158
    %v195 = vunpack.c.l.b16 %v159
    %v196 = vunpack.c.l.b16 %v160
    %v197 = vpack.c.b16 %v182, %v181
    %v198 = vpack.c.b16 %v184, %v183
    %v199 = vpack.c.b16 %v186, %v185
    %v200 = vpack.c.b16 %v188, %v187
    %v201 = vpack.c.b16 %v190, %v189
    %v202 = vpack.c.b16 %v192, %v191
    %v203 = vpack.c.b16 %v194, %v193
    %v204 = vpack.c.b16 %v196, %v195
    %213 = vmatpush.bf16.msra.mxu0 %v204
    %214 = vmatpush.bf16.msra.mxu0 %v203
    %215 = vmatpush.bf16.msra.mxu0 %v202
    %216 = vmatpush.bf16.msra.mxu0 %v201
    %217 = vmatpush.bf16.msra.mxu0 %v200
    %218 = vmatpush.bf16.msra.mxu0 %v199
    %219 = vmatpush.bf16.msra.mxu0 %v198
    %220 = vmatpush.bf16.msra.mxu0 %v197
    %221 = vmatmul.bf16.gmra.mxu0 %v144
    %v222 = vpop.f32.mrf.mxu0
    %v223 = vadd.f32 %v163, %v222
    %v224 = vpop.f32.mrf.mxu0
    %225 = vdwg.mxu0
    %v226 = vmax.f32 %v223, 0.0
    %v227 = vpack.c.bf16 %v226, %v226
    %v228 = vld [vmem:[#allocation7] sm:$0xf]
    %v229 = vld [vmem:[#allocation7 + $0x4] sm:$0xf]
    %v230 = vld [vmem:[#allocation7 + $0x8] sm:$0xf]
    %v231 = vld [vmem:[#allocation7 + $0xc] sm:$0xf]
    %v232 = vld [vmem:[#allocation7 + $0x10] sm:$0xf]
    %v233 = vld [vmem:[#allocation7 + $0x14] sm:$0xf]
    %v234 = vld [vmem:[#allocation7 + $0x18] sm:$0xf]
    %v235 = vld [vmem:[#allocation7 + $0x1c] sm:$0xf]
    %v236 = vld [vmem:[#allocation7 + $0x20] sm:$0xf]
    %v237 = vld [vmem:[#allocation7 + $0x24] sm:$0xf]
    %v238 = vld [vmem:[#allocation7 + $0x28] sm:$0xf]
    %v239 = vld [vmem:[#allocation7 + $0x2c] sm:$0xf]
    %v240 = vld [vmem:[#allocation7 + $0x30] sm:$0xf]
    %v241 = vld [vmem:[#allocation7 + $0x34] sm:$0xf]
    %v242 = vld [vmem:[#allocation7 + $0x38] sm:$0xf]
    %v243 = vld [vmem:[#allocation7 + $0x3c] sm:$0xf]
    %v244 = vld [vmem:[#allocation8] sm:$0x1]
    %v246 = vperm.slane %v244, 0
    %v264 = vunpack.c.l.b16 %v228
    %v265 = vunpack.c.l.b16 %v229
    %v266 = vunpack.c.l.b16 %v230
    %v267 = vunpack.c.l.b16 %v231
    %v268 = vunpack.c.l.b16 %v232
    %v269 = vunpack.c.l.b16 %v233
    %v270 = vunpack.c.l.b16 %v234
    %v271 = vunpack.c.l.b16 %v235
    %v272 = vunpack.c.l.b16 %v236
    %v273 = vunpack.c.l.b16 %v237
    %v274 = vunpack.c.l.b16 %v238
    %v275 = vunpack.c.l.b16 %v239
    %v276 = vunpack.c.l.b16 %v240
    %v277 = vunpack.c.l.b16 %v241
    %v278 = vunpack.c.l.b16 %v242
    %v279 = vunpack.c.l.b16 %v243
    %v280 = vpack.c.b16 %v265, %v264
    %v281 = vpack.c.b16 %v267, %v266
    %v282 = vpack.c.b16 %v269, %v268
    %v283 = vpack.c.b16 %v271, %v270
    %v284 = vpack.c.b16 %v273, %v272
    %v285 = vpack.c.b16 %v275, %v274
    %v286 = vpack.c.b16 %v277, %v276
    %v287 = vpack.c.b16 %v279, %v278
    %296 = vmatpush.bf16.msra.mxu0 %v287
    %297 = vmatpush.bf16.msra.mxu0 %v286
    %298 = vmatpush.bf16.msra.mxu0 %v285
    %299 = vmatpush.bf16.msra.mxu0 %v284
    %300 = vmatpush.bf16.msra.mxu0 %v283
    %301 = vmatpush.bf16.msra.mxu0 %v282
    %302 = vmatpush.bf16.msra.mxu0 %v281
    %303 = vmatpush.bf16.msra.mxu0 %v280
    %304 = vmatmul.bf16.gmra.mxu0 %v227
    %v305 = vpop.f32.mrf.mxu0
    %v306 = vadd.f32 %v246, %v305
    %v307 = vpop.f32.mrf.mxu0
    %308 = vdwg.mxu0
    %v309 = vmax.f32 %v306, 0.0
    %v310 = vpack.c.bf16 %v309, %v309
    %v311 = vld [vmem:[#allocation10] sm:$0xf]
    %v312 = vld [vmem:[#allocation10 + $0x4] sm:$0xf]
    %v313 = vld [vmem:[#allocation10 + $0x8] sm:$0xf]
    %v314 = vld [vmem:[#allocation10 + $0xc] sm:$0xf]
    %v315 = vld [vmem:[#allocation10 + $0x10] sm:$0xf]
    %v316 = vld [vmem:[#allocation10 + $0x14] sm:$0xf]
    %v317 = vld [vmem:[#allocation10 + $0x18] sm:$0xf]
    %v318 = vld [vmem:[#allocation10 + $0x1c] sm:$0xf]
    %v319 = vld [vmem:[#allocation10 + $0x20] sm:$0xf]
    %v320 = vld [vmem:[#allocation10 + $0x24] sm:$0xf]
    %v321 = vld [vmem:[#allocation10 + $0x28] sm:$0xf]
    %v322 = vld [vmem:[#allocation10 + $0x2c] sm:$0xf]
    %v323 = vld [vmem:[#allocation10 + $0x30] sm:$0xf]
    %v324 = vld [vmem:[#allocation10 + $0x34] sm:$0xf]
    %v325 = vld [vmem:[#allocation10 + $0x38] sm:$0xf]
    %v326 = vld [vmem:[#allocation10 + $0x3c] sm:$0xf]
    %v327 = vld [vmem:[%s6] sm:$0x1]
    %v329 = vperm.slane %v327, 0
    %v347 = vunpack.c.l.b16 %v311
    %v348 = vunpack.c.l.b16 %v312
    %v349 = vunpack.c.l.b16 %v313
    %v350 = vunpack.c.l.b16 %v314
    %v351 = vunpack.c.l.b16 %v315
    %v352 = vunpack.c.l.b16 %v316
    %v353 = vunpack.c.l.b16 %v317
    %v354 = vunpack.c.l.b16 %v318
    %v355 = vunpack.c.l.b16 %v319
    %v356 = vunpack.c.l.b16 %v320
    %v357 = vunpack.c.l.b16 %v321
    %v358 = vunpack.c.l.b16 %v322
    %v359 = vunpack.c.l.b16 %v323
    %v360 = vunpack.c.l.b16 %v324
    %v361 = vunpack.c.l.b16 %v325
    %v362 = vunpack.c.l.b16 %v326
    %v363 = vpack.c.b16 %v348, %v347
    %v364 = vpack.c.b16 %v350, %v349
    %v365 = vpack.c.b16 %v352, %v351
    %v366 = vpack.c.b16 %v354, %v353
    %v367 = vpack.c.b16 %v356, %v355
    %v368 = vpack.c.b16 %v358, %v357
    %v369 = vpack.c.b16 %v360, %v359
    %v370 = vpack.c.b16 %v362, %v361
    %379 = vmatpush.bf16.msra.mxu0 %v370
    %380 = vmatpush.bf16.msra.mxu0 %v369
    %381 = vmatpush.bf16.msra.mxu0 %v368
    %382 = vmatpush.bf16.msra.mxu0 %v367
    %383 = vmatpush.bf16.msra.mxu0 %v366
    %384 = vmatpush.bf16.msra.mxu0 %v365
    %385 = vmatpush.bf16.msra.mxu0 %v364
    %386 = vmatpush.bf16.msra.mxu0 %v363
    %387 = vmatmul.bf16.gmra.mxu0 %v310
    %v388 = vpop.f32.mrf.mxu0
    %v389 = vadd.f32 %v329, %v388
    %v390 = vpop.f32.mrf.mxu0
    %391 = vdwg.mxu0
    %v392 = vmax.f32 %v389, 0.0
    %v393 = vpack.c.bf16 %v392, %v392
    %v394 = vld [vmem:[#allocation11] sm:$0xf]
    %v395 = vld [vmem:[#allocation11 + $0x4] sm:$0xf]
    %v396 = vld [vmem:[#allocation11 + $0x8] sm:$0xf]
    %v397 = vld [vmem:[#allocation11 + $0xc] sm:$0xf]
    %v398 = vld [vmem:[#allocation11 + $0x10] sm:$0xf]
    %v399 = vld [vmem:[#allocation11 + $0x14] sm:$0xf]
    %v400 = vld [vmem:[#allocation11 + $0x18] sm:$0xf]
    %v401 = vld [vmem:[#allocation11 + $0x1c] sm:$0xf]
    %v402 = vld [vmem:[#allocation11 + $0x20] sm:$0xf]
    %v403 = vld [vmem:[#allocation11 + $0x24] sm:$0xf]
    %v404 = vld [vmem:[#allocation11 + $0x28] sm:$0xf]
    %v405 = vld [vmem:[#allocation11 + $0x2c] sm:$0xf]
    %v406 = vld [vmem:[#allocation11 + $0x30] sm:$0xf]
    %v407 = vld [vmem:[#allocation11 + $0x34] sm:$0xf]
    %v408 = vld [vmem:[#allocation11 + $0x38] sm:$0xf]
    %v409 = vld [vmem:[#allocation11 + $0x3c] sm:$0xf]
    %v410 = vld [vmem:[%s8] sm:$0x1]
    %v412 = vperm.slane %v410, 0
    %v430 = vunpack.c.l.b16 %v394
    %v431 = vunpack.c.l.b16 %v395
    %v432 = vunpack.c.l.b16 %v396
    %v433 = vunpack.c.l.b16 %v397
    %v434 = vunpack.c.l.b16 %v398
    %v435 = vunpack.c.l.b16 %v399
    %v436 = vunpack.c.l.b16 %v400
    %v437 = vunpack.c.l.b16 %v401
    %v438 = vunpack.c.l.b16 %v402
    %v439 = vunpack.c.l.b16 %v403
    %v440 = vunpack.c.l.b16 %v404
    %v441 = vunpack.c.l.b16 %v405
    %v442 = vunpack.c.l.b16 %v406
    %v443 = vunpack.c.l.b16 %v407
    %v444 = vunpack.c.l.b16 %v408
    %v445 = vunpack.c.l.b16 %v409
    %v446 = vpack.c.b16 %v431, %v430
    %v447 = vpack.c.b16 %v433, %v432
    %v448 = vpack.c.b16 %v435, %v434
    %v449 = vpack.c.b16 %v437, %v436
    %v450 = vpack.c.b16 %v439, %v438
    %v451 = vpack.c.b16 %v441, %v440
    %v452 = vpack.c.b16 %v443, %v442
    %v453 = vpack.c.b16 %v445, %v444
    %462 = vmatpush.bf16.msra.mxu0 %v453
    %463 = vmatpush.bf16.msra.mxu0 %v452
    %464 = vmatpush.bf16.msra.mxu0 %v451
    %465 = vmatpush.bf16.msra.mxu0 %v450
    %466 = vmatpush.bf16.msra.mxu0 %v449
    %467 = vmatpush.bf16.msra.mxu0 %v448
    %468 = vmatpush.bf16.msra.mxu0 %v447
    %469 = vmatpush.bf16.msra.mxu0 %v446
    %470 = vmatmul.bf16.gmra.mxu0 %v393
    %v471 = vpop.f32.mrf.mxu0
    %v472 = vadd.f32 %v412, %v471
    %v473 = vpop.f32.mrf.mxu0
    %474 = vdwg.mxu0
    %v475 = vmax.f32 %v472, 0.0
    %v476 = vpack.c.bf16 %v475, %v475
    %v477 = vld [vmem:[#allocation13] sm:$0xff]
    %v478 = vld [vmem:[#allocation13 + $0x8] sm:$0xff]
    %v479 = vld [vmem:[#allocation13 + $0x10] sm:$0xff]
    %v480 = vld [vmem:[#allocation13 + $0x18] sm:$0xff]
    %v481 = vld [vmem:[#allocation13 + $0x20] sm:$0xff]
    %v482 = vld [vmem:[#allocation13 + $0x28] sm:$0xff]
    %v483 = vld [vmem:[#allocation13 + $0x30] sm:$0xff]
    %v484 = vld [vmem:[#allocation13 + $0x38] sm:$0xff]
    %v485 = vld [vmem:[#allocation13 + $0x40] sm:$0xff]
    %v486 = vld [vmem:[#allocation13 + $0x48] sm:$0xff]
    %v487 = vld [vmem:[#allocation13 + $0x50] sm:$0xff]
    %v488 = vld [vmem:[#allocation13 + $0x58] sm:$0xff]
    %v489 = vld [vmem:[#allocation13 + $0x60] sm:$0xff]
    %v490 = vld [vmem:[#allocation13 + $0x68] sm:$0xff]
    %v491 = vld [vmem:[#allocation13 + $0x70] sm:$0xff]
    %v492 = vld [vmem:[#allocation13 + $0x78] sm:$0xff]
    %v493 = vld [vmem:[%s10] sm:$0x3]
    %v495 = vperm.slane %v493, 0
    %v496 = vperm.slane %v493, 1
    %v515 = vunpack.c.l.b16 %v477
    %v516 = vunpack.c.h.b16 %v477
    %v517 = vunpack.c.l.b16 %v478
    %v518 = vunpack.c.h.b16 %v478
    %v519 = vunpack.c.l.b16 %v479
    %v520 = vunpack.c.h.b16 %v479
    %v521 = vunpack.c.l.b16 %v480
    %v522 = vunpack.c.h.b16 %v480
    %v523 = vunpack.c.l.b16 %v481
    %v524 = vunpack.c.h.b16 %v481
    %v525 = vunpack.c.l.b16 %v482
    %v526 = vunpack.c.h.b16 %v482
    %v527 = vunpack.c.l.b16 %v483
    %v528 = vunpack.c.h.b16 %v483
    %v529 = vunpack.c.l.b16 %v484
    %v530 = vunpack.c.h.b16 %v484
    %v531 = vunpack.c.l.b16 %v485
    %v532 = vunpack.c.h.b16 %v485
    %v533 = vunpack.c.l.b16 %v486
    %v534 = vunpack.c.h.b16 %v486
    %v535 = vunpack.c.l.b16 %v487
    %v536 = vunpack.c.h.b16 %v487
    %v537 = vunpack.c.l.b16 %v488
    %v538 = vunpack.c.h.b16 %v488
    %v539 = vunpack.c.l.b16 %v489
    %v540 = vunpack.c.h.b16 %v489
    %v541 = vunpack.c.l.b16 %v490
    %v542 = vunpack.c.h.b16 %v490
    %v543 = vunpack.c.l.b16 %v491
    %v544 = vunpack.c.h.b16 %v491
    %v545 = vunpack.c.l.b16 %v492
    %v546 = vunpack.c.h.b16 %v492
    %v547 = vpack.c.b16 %v517, %v515
    %v548 = vpack.c.b16 %v518, %v516
    %v549 = vpack.c.b16 %v521, %v519
    %v550 = vpack.c.b16 %v522, %v520
    %v551 = vpack.c.b16 %v525, %v523
    %v552 = vpack.c.b16 %v526, %v524
    %v553 = vpack.c.b16 %v529, %v527
    %v554 = vpack.c.b16 %v530, %v528
    %v555 = vpack.c.b16 %v533, %v531
    %v556 = vpack.c.b16 %v534, %v532
    %v557 = vpack.c.b16 %v537, %v535
    %v558 = vpack.c.b16 %v538, %v536
    %v559 = vpack.c.b16 %v541, %v539
    %v560 = vpack.c.b16 %v542, %v540
    %v561 = vpack.c.b16 %v545, %v543
    %v562 = vpack.c.b16 %v546, %v544
    %579 = vmatpush.bf16.msra.mxu0 %v561
    %580 = vmatpush.bf16.msra.mxu0 %v559
    %581 = vmatpush.bf16.msra.mxu0 %v557
    %582 = vmatpush.bf16.msra.mxu0 %v555
    %583 = vmatpush.bf16.msra.mxu0 %v553
    %584 = vmatpush.bf16.msra.mxu0 %v551
    %585 = vmatpush.bf16.msra.mxu0 %v549
    %586 = vmatpush.bf16.msra.mxu0 %v547
    %587 = vmatmul.bf16.gmra.mxu0 %v476
    %v588 = vpop.f32.mrf.mxu0
    %v589 = vadd.f32 %v495, %v588
    %v590 = vpop.f32.mrf.mxu0
    %591 = vdwg.mxu0
    %592 = vmatpush.bf16.msra.mxu0 %v562
    %593 = vmatpush.bf16.msra.mxu0 %v560
    %594 = vmatpush.bf16.msra.mxu0 %v558
    %595 = vmatpush.bf16.msra.mxu0 %v556
    %596 = vmatpush.bf16.msra.mxu0 %v554
    %597 = vmatpush.bf16.msra.mxu0 %v552
    %598 = vmatpush.bf16.msra.mxu0 %v550
    %599 = vmatpush.bf16.msra.mxu0 %v548
    %600 = vmatmul.bf16.gmra.mxu0 %v476
    %v601 = vpop.f32.mrf.mxu0
    %v602 = vadd.f32 %v496, %v601
    %v603 = vpop.f32.mrf.mxu0
    %604 = vdwg.mxu0
    %605 = vst [vmem:[#allocation14] sm:$0xff] %v589
    %606 = vst [vmem:[#allocation14 + $0x8] sm:$0xff] %v602
    // Predicated region
    $region74: #{tpu_custom_call.1} parent=1 // pred_check
      _
    $region75: #{tpu_custom_call.1} parent=1 // pred_check_branch
      %608 = sbr.rel (0) target = $region77
    $region76: #{tpu_custom_call.1} parent=1 // pred_region
      %610 = vsyncadd [#allocation4], 0
      %s612 = sshll.u32 [#allocation14], 4
      %s613 = int_to_ptr.vmem [resolvable:$true] %s612
      %s614 = sshll.u32 %s11, 4
      %s615 = int_to_ptr.hbm [resolvable:$true] %s614
      %617 = dma.vmem_to_hbm [thread:$0]  %s613, 256, %s615, [#allocation4]
    $region77: #{tpu_custom_call.1} parent=1 // pred_fallthru
      _
    // Predicated region
    $region78: #{tpu_custom_call.1} parent=1 // pred_check
      _
    $region79: #{tpu_custom_call.1} parent=1 // pred_check_branch
      %619 = sbr.rel (0) target = $region81
    $region80: #{tpu_custom_call.1} parent=1 // pred_region
      %621 = dma.done [#allocation4], 256
    $region81: #{tpu_custom_call.1} parent=1 // pred_fallthru
      _
    %622 = vsyncpa [#allocation3], 1
    %623 = vsyncpa [#allocation6], 1
    %624 = vsyncpa [#allocation9], 1
    %625 = vsyncpa [#allocation12], 1
    %626 = vsyncpa [#allocation4], 1

</llo_original>
